<compile_context>
chip_gen: v6e
topology: v6e:2x2x1
jax: 0.10.0
libtpu: 0.0.40
codegen_flags: <defaults>
</compile_context>

<pallas_src>
import math

import jax
import jax.numpy as jnp
from jax import lax
from jax.experimental import pallas as pl
from jax.experimental.pallas import tpu as pltpu


def _round_up(x, m):
    return ((x + m - 1) // m) * m


def _vmem_capacity_bytes():
    """Physical VMEM per TensorCore; conservative 64 MiB fallback (v7x)."""
    try:
        return int(pltpu.get_tpu_info().vmem_capacity_bytes)
    except Exception:
        return 64 * 1024 * 1024


def _aligned_divisors(H, align=128):
    divs = [d for d in range(align, H + 1, align) if H % d == 0]
    return divs or [H]


def _block_vmem_bytes(tm, th, C, c_size, o_size):
    """Rough per-step VMEM footprint (double-buffered inputs/outputs + scratch)."""
    b = 2 * tm * C * c_size                      # x row tile
    b += 2 * C * th * c_size                     # W1 hidden slice
    b += 2 * th * C * c_size                     # W2 hidden slice
    b += 2 * 8 * max(th, 128) * 4                # b1 (f32, padded)
    b += 2 * 8 * max(C, 128) * 4                 # b2 (f32, padded)
    b += 2 * tm * C * o_size                     # output tile
    b += tm * C * 4                              # f32 accumulator scratch
    b += 2 * tm * th * 4                         # f32 hidden/GELU intermediates
    return b


def _select_tiles(M, C, H, tm_req, th_req, c_size, o_size, budget):
    divs = _aligned_divisors(H)                  # ascending, all divide H
    th_cands = [d for d in divs if d <= th_req]
    th = th_cands[-1] if th_cands else divs[0]

    tm = min(tm_req, _round_up(M, 8))
    # Keep >= 2 row tiles for medium/large M so both v7x TensorCores get work.
    if M >= 256 and _round_up(M, tm) // tm < 2:
        tm = _round_up((M + 1) // 2, 8)

    # Shrink th (then tm) until the block footprint fits the VMEM budget.
    while _block_vmem_bytes(tm, th, C, c_size, o_size) > budget:
        smaller = [d for d in divs if d < th]
        if smaller:
            th = smaller[-1]
        elif tm > 8:
            tm = max(8, _round_up(tm // 2, 8))
        else:
            break
    return tm, th


def _ffn_kernel(x_ref, w1_ref, b1_ref, w2_ref, b2_ref, o_ref, acc_ref):
    hk = pl.program_id(1)

    @pl.when(hk == 0)
    def _():
        # Seed the accumulator with the output bias -> saves a (tm, C) f32 add later.
        acc_ref[...] = jnp.broadcast_to(
            b2_ref[...].astype(jnp.float32), acc_ref.shape)

    # First linear on this hidden slice: (tm, C) @ (C, th) -> (tm, th), f32 acc.
    h = jnp.dot(x_ref[...], w1_ref[...], preferred_element_type=jnp.float32)
    h = h + b1_ref[...].astype(jnp.float32)

    # Exact GELU (nn.GELU default, approximate='none'), computed in f32.
    h = 0.5 * h * (1.0 + lax.erf(h * (1.0 / math.sqrt(2.0))))

    # Second linear partial sum over this hidden slice, accumulate in f32.
    acc_ref[...] += jnp.dot(h.astype(w2_ref.dtype), w2_ref[...],
                            preferred_element_type=jnp.float32)

    @pl.when(hk == pl.num_programs(1) - 1)
    def _():
        o_ref[...] = acc_ref[...].astype(o_ref.dtype)


def feed_forward(x, w1, b1, w2, b2, *, tm=None, th=None,
                 compute_dtype=jnp.bfloat16):
    """x: (B, T, C); w1: (C, 4C); b1: (4C,); w2: (4C, C); b2: (C,)."""
    B, T, C = x.shape
    H = w1.shape[1]
    out_dtype = x.dtype
    if compute_dtype is None:
        compute_dtype = x.dtype
    c_size = jnp.dtype(compute_dtype).itemsize
    o_size = jnp.dtype(out_dtype).itemsize

    # Generation-aware defaults: 128 MiB parts (v5e/v6e) get fatter tiles than v7x.
    vmem_cap = _vmem_capacity_bytes()
    big_vmem = vmem_cap >= 100 * 1024 * 1024
    if tm is None:
        tm = 512 if big_vmem else 256
    if th is None:
        th = 1024 if big_vmem else 512
    vmem_limit = int(vmem_cap * 0.80)
    fit_budget = int(vmem_limit * 0.85)

    M = B * T
    # TODO(synk): add an output-column (over C) grid axis for very large embeddings
    # (C >= 4-8K) so block memory stops scaling with C on v7x's 64 MiB VMEM.
    tm_eff, th_eff = _select_tiles(M, C, H, tm, th, c_size, o_size, fit_budget)
    M_pad = _round_up(M, tm_eff)
    grid_rows = M_pad // tm_eff
    grid = (grid_rows, H // th_eff)

    # Avoid redundant HBM passes: cast/pad only when needed.  For production,
    # pre-cast the weights to compute_dtype once outside the hot path.
    x2 = x.reshape(M, C)
    if x2.dtype != compute_dtype:
        x2 = x2.astype(compute_dtype)
    if M_pad != M:
        x2 = jnp.pad(x2, ((0, M_pad - M), (0, 0)))   # only the ragged tail tile
    w1c = w1 if w1.dtype == compute_dtype else w1.astype(compute_dtype)
    w2c = w2 if w2.dtype == compute_dtype else w2.astype(compute_dtype)
    b1_2 = b1.reshape(1, H).astype(jnp.float32)
    b2_2 = b2.reshape(1, C).astype(jnp.float32)

    # True DMA traffic: weights are re-streamed once per row tile.
    cost = pl.CostEstimate(
        flops=4 * M_pad * C * H,                     # two matmuls
        transcendentals=M_pad * H,                   # erf per hidden element
        bytes_accessed=int(
            x2.size * c_size
            + grid_rows * (w1c.size + w2c.size) * c_size
            + grid_rows * (b1_2.size + b2_2.size) * 4
            + M_pad * C * o_size),
    )

    out = pl.pallas_call(
        _ffn_kernel,
        out_shape=jax.ShapeDtypeStruct((M_pad, C), out_dtype),
        grid_spec=pltpu.PrefetchScalarGridSpec(
            num_scalar_prefetch=0,
            grid=grid,
            in_specs=[
                pl.BlockSpec((tm_eff, C), lambda i, hk: (i, 0)),   # x rows (resident over hk)
                pl.BlockSpec((C, th_eff), lambda i, hk: (0, hk)),  # W1 hidden slice
                pl.BlockSpec((1, th_eff), lambda i, hk: (0, hk)),  # b1 hidden slice
                pl.BlockSpec((th_eff, C), lambda i, hk: (hk, 0)),  # W2 hidden slice
                pl.BlockSpec((1, C), lambda i, hk: (0, 0)),        # b2 (resident)
            ],
            out_specs=pl.BlockSpec((tm_eff, C), lambda i, hk: (i, 0)),
            scratch_shapes=[pltpu.VMEM((tm_eff, C), jnp.float32)],
        ),
        compiler_params=pltpu.CompilerParams(
            dimension_semantics=("parallel", "arbitrary"),
            vmem_limit_bytes=vmem_limit,
        ),
        cost_estimate=cost,
    )(x2, w1c, b1_2, w2c, b2_2)

    if M_pad != M:
        out = out[:M]
    return out.reshape(B, T, C)


def feed_forward_ref(x, w1, b1, w2, b2):
    h = x @ w1 + b1
    h = 0.5 * h * (1.0 + lax.erf(h / jnp.sqrt(2.0).astype(h.dtype)))
    return h @ w2 + b2


if __name__ == "__main__":
    B, T, n_embd = 2, 8, 32
    hidden = 4 * n_embd

    key = jax.random.PRNGKey(0)
    kx, k1, k2, k3, k4 = jax.random.split(key, 5)

    x = jax.random.normal(kx, (B, T, n_embd), dtype=jnp.float32)
    # Deterministic parameter init (PyTorch-like uniform bounds).
    bound1 = 1.0 / math.sqrt(n_embd)
    bound2 = 1.0 / math.sqrt(hidden)
    w1 = jax.random.uniform(k1, (n_embd, hidden), jnp.float32, -bound1, bound1)
    b1 = jax.random.uniform(k2, (hidden,), jnp.float32, -bound1, bound1)
    w2 = jax.random.uniform(k3, (hidden, n_embd), jnp.float32, -bound2, bound2)
    b2 = jax.random.uniform(k4, (n_embd,), jnp.float32, -bound2, bound2)

    y_ref = feed_forward_ref(x, w1, b1, w2, b2)

    # Exact path (f32 MXU operands): strict parity with the reference math.
    y_f32 = feed_forward(x, w1, b1, w2, b2, compute_dtype=jnp.float32)
    jax.block_until_ready(y_f32)
    assert jnp.allclose(y_f32, y_ref, atol=1e-5, rtol=1e-5), "f32 mismatch vs reference"

    # Production path (bf16 MXU operands, f32 accumulation / GELU / bias adds).
    y_bf16 = feed_forward(x, w1, b1, w2, b2, compute_dtype=jnp.bfloat16)
    jax.block_until_ready(y_bf16)
    assert jnp.allclose(y_bf16, y_ref, atol=5e-2, rtol=5e-2), "bf16 mismatch vs reference"

    print("KERNEL_OK")
</pallas_src>

<mosaic_0001>
module attributes {stable_mosaic.version = 11 : i64} {
  func.func @_ffn_kernel(%arg0: i32, %arg1: i32, %arg2: memref<16x32xf32, #tpu.memory_space<vmem>>, %arg3: memref<32x128xf32, #tpu.memory_space<vmem>>, %arg4: memref<1x128xf32, #tpu.memory_space<vmem>>, %arg5: memref<128x32xf32, #tpu.memory_space<vmem>>, %arg6: memref<1x32xf32, #tpu.memory_space<vmem>>, %arg7: memref<16x32xf32, #tpu.memory_space<vmem>>, %arg8: memref<16x32xf32, #tpu.memory_space<vmem>>) attributes {dimension_semantics = [#tpu.dimension_semantics<parallel>, #tpu.dimension_semantics<arbitrary>], iteration_bounds = array<i64: 1, 1>, scalar_prefetch = 0 : i64, scratch_operands = 1 : i64, tpu.core_type = #tpu.core_type<tc>, window_params = [{transform_indices = @transform_0, window_bounds = array<i64: 16, 32>}, {transform_indices = @transform_1, window_bounds = array<i64: 32, 128>}, {transform_indices = @transform_2, window_bounds = array<i64: 1, 128>}, {transform_indices = @transform_3, window_bounds = array<i64: 128, 32>}, {pipeline_mode = #tpu.pipeline_mode<synchronous>, transform_indices = @transform_4, window_bounds = array<i64: 1, 32>}, {transform_indices = @transform_5, window_bounds = array<i64: 16, 32>}]} {
    %c0_i32 = arith.constant 0 : i32
    %0 = arith.cmpi eq, %arg1, %c0_i32 : i32
    %1 = arith.extui %0 : i1 to i32
    %c0_i32_0 = arith.constant 0 : i32
    %2 = arith.cmpi ne, %1, %c0_i32_0 : i32
    scf.if %2 {
      %c0_18 = arith.constant 0 : index
      %c0_19 = arith.constant 0 : index
      %25 = vector.load %arg6[%c0_18, %c0_19] : memref<1x32xf32, #tpu.memory_space<vmem>>, vector<1x32xf32>
      %26 = vector.shape_cast %25 : vector<1x32xf32> to vector<1x32xf32>
      %27 = vector.broadcast %26 : vector<1x32xf32> to vector<16x32xf32>
      %c0_20 = arith.constant 0 : index
      %c0_21 = arith.constant 0 : index
      %28 = vector.load %arg8[%c0_20, %c0_21] : memref<16x32xf32, #tpu.memory_space<vmem>>, vector<16x32xf32>
      tpu.vector_store %arg8[%c0_20, %c0_21], %27 {strides = array<i32>} : memref<16x32xf32, #tpu.memory_space<vmem>>, vector<16x32xf32>,
    } else {
    }
    %c0 = arith.constant 0 : index
    %c0_1 = arith.constant 0 : index
    %3 = vector.load %arg2[%c0, %c0_1] : memref<16x32xf32, #tpu.memory_space<vmem>>, vector<16x32xf32>
    %c0_2 = arith.constant 0 : index
    %c0_3 = arith.constant 0 : index
    %4 = vector.load %arg3[%c0_2, %c0_3] : memref<32x128xf32, #tpu.memory_space<vmem>>, vector<32x128xf32>
    %cst = arith.constant dense<0.000000e+00> : vector<16x128xf32>
    %5 = tpu.matmul %3, %4, %cst {dimension_numbers = #tpu.dot_dimension_numbers<[1], [0], [0], [1], [0, 0, 1, 1], [], []>} : vector<16x32xf32>, vector<32x128xf32>, vector<16x128xf32> -> vector<16x128xf32>
    %c0_4 = arith.constant 0 : index
    %c0_5 = arith.constant 0 : index
    %6 = vector.load %arg4[%c0_4, %c0_5] : memref<1x128xf32, #tpu.memory_space<vmem>>, vector<1x128xf32>
    %7 = vector.broadcast %6 : vector<1x128xf32> to vector<16x128xf32>
    %8 = arith.addf %5, %7 : vector<16x128xf32>
    %cst_6 = arith.constant 5.000000e-01 : f32
    %9 = vector.broadcast %cst_6 : f32 to vector<16x128xf32>
    %10 = arith.mulf %9, %8 : vector<16x128xf32>
    %cst_7 = arith.constant 0.707106769 : f32
    %11 = vector.broadcast %cst_7 : f32 to vector<16x128xf32>
    %12 = arith.mulf %8, %11 : vector<16x128xf32>
    %13 = math.erf %12 : vector<16x128xf32>
    %cst_8 = arith.constant 1.000000e+00 : f32
    %14 = vector.broadcast %cst_8 : f32 to vector<16x128xf32>
    %15 = arith.addf %14, %13 : vector<16x128xf32>
    %16 = arith.mulf %10, %15 : vector<16x128xf32>
    %c0_9 = arith.constant 0 : index
    %c0_10 = arith.constant 0 : index
    %17 = vector.load %arg8[%c0_9, %c0_10] : memref<16x32xf32, #tpu.memory_space<vmem>>, vector<16x32xf32>
    %c0_11 = arith.constant 0 : index
    %c0_12 = arith.constant 0 : index
    %18 = vector.load %arg5[%c0_11, %c0_12] : memref<128x32xf32, #tpu.memory_space<vmem>>, vector<128x32xf32>
    %cst_13 = arith.constant dense<0.000000e+00> : vector<16x32xf32>
    %19 = tpu.matmul %16, %18, %cst_13 {dimension_numbers = #tpu.dot_dimension_numbers<[1], [0], [0], [1], [0, 0, 1, 1], [], []>} : vector<16x128xf32>, vector<128x32xf32>, vector<16x32xf32> -> vector<16x32xf32>
    %20 = arith.addf %17, %19 : vector<16x32xf32>
    %c0_14 = arith.constant 0 : index
    %c0_15 = arith.constant 0 : index
    %21 = vector.load %arg8[%c0_14, %c0_15] : memref<16x32xf32, #tpu.memory_space<vmem>>, vector<16x32xf32>
    tpu.vector_store %arg8[%c0_14, %c0_15], %20 {strides = array<i32>} : memref<16x32xf32, #tpu.memory_space<vmem>>, vector<16x32xf32>,
    %c0_i32_16 = arith.constant 0 : i32
    %22 = arith.cmpi eq, %arg1, %c0_i32_16 : i32
    %23 = arith.extui %22 : i1 to i32
    %c0_i32_17 = arith.constant 0 : i32
    %24 = arith.cmpi ne, %23, %c0_i32_17 : i32
    scf.if %24 {
      %c0_18 = arith.constant 0 : index
      %c0_19 = arith.constant 0 : index
      %25 = vector.load %arg8[%c0_18, %c0_19] : memref<16x32xf32, #tpu.memory_space<vmem>>, vector<16x32xf32>
      %c0_20 = arith.constant 0 : index
      %c0_21 = arith.constant 0 : index
      %26 = vector.load %arg7[%c0_20, %c0_21] : memref<16x32xf32, #tpu.memory_space<vmem>>, vector<16x32xf32>
      tpu.vector_store %arg7[%c0_20, %c0_21], %25 {strides = array<i32>} : memref<16x32xf32, #tpu.memory_space<vmem>>, vector<16x32xf32>,
    } else {
    }
    return
  }
  func.func @transform_0(%arg0: i32, %arg1: i32) -> (i32, i32) {
    %c0_i32 = arith.constant 0 : i32
    %c0_i32_0 = arith.constant 0 : i32
    return %arg0, %c0_i32 : i32, i32
  }
  func.func @transform_1(%arg0: i32, %arg1: i32) -> (i32, i32) {
    %c0_i32 = arith.constant 0 : i32
    %c0_i32_0 = arith.constant 0 : i32
    return %c0_i32, %arg1 : i32, i32
  }
  func.func @transform_2(%arg0: i32, %arg1: i32) -> (i32, i32) {
    %c0_i32 = arith.constant 0 : i32
    %c0_i32_0 = arith.constant 0 : i32
    return %c0_i32, %arg1 : i32, i32
  }
  func.func @transform_3(%arg0: i32, %arg1: i32) -> (i32, i32) {
    %c0_i32 = arith.constant 0 : i32
    %c0_i32_0 = arith.constant 0 : i32
    return %arg1, %c0_i32 : i32, i32
  }
  func.func @transform_4(%arg0: i32, %arg1: i32) -> (i32, i32) {
    %c0_i32 = arith.constant 0 : i32
    %c0_i32_0 = arith.constant 0 : i32
    %c0_i32_1 = arith.constant 0 : i32
    return %c0_i32, %c0_i32_0 : i32, i32
  }
  func.func @transform_5(%arg0: i32, %arg1: i32) -> (i32, i32) {
    %c0_i32 = arith.constant 0 : i32
    %c0_i32_0 = arith.constant 0 : i32
    return %arg0, %c0_i32 : i32, i32
  }
}

</mosaic_0001>

<llo_original>
// kernel: tpu_custom_call.1
$region0: #{tpu_custom_call.1}
  #allocation0 [shape = 'u32[]', space=smem, size = 0x4, offset = 0x4, fixed_abs, tag = 'smem constant byte address 0x4 - core index']
  #allocation1 [shape = 'u32[144,128]{1,0:T(1,128)}', space=vmem, size = 0x12000, scoped, tag = 'internal scratch']
  #allocation2 [shape = 'f32[16,32]{1,0:T(8,128)}', space=vmem, size = 0x2000, scoped, tag = 'scratch operand']
  %s0 = inlined_call_operand.vmem [shape: f32[16,32], index: 0, kind: input, shape index: {}]
  %s1 = inlined_call_operand.vmem [shape: f32[32,128], index: 1, kind: input, shape index: {}]
  %s2 = inlined_call_operand.vmem [shape: f32[1,128], index: 2, kind: input, shape index: {}]
  %s3 = inlined_call_operand.vmem [shape: f32[128,32], index: 3, kind: input, shape index: {}]
  %s4 = inlined_call_operand.vmem [shape: f32[1,32], index: 4, kind: input, shape index: {}]
  %s5 = inlined_call_operand.hbm [shape: f32[16,32], index: 5, kind: output, shape index: {}]
  %s6 = sld [smem:[#allocation0]]
  $region38: #{tpu_custom_call.1} parent=0
    _
  %s8 = ssub.s32 1, %s6
  %s9 = scalar_select 0, %s8, %s6
  $region1: #{tpu_custom_call.1} parent=0
    #allocation3 [shape = 'u8[8192]{0}', space=vmem, size = 0x2000, scoped, tag = 'output window, operand 0, single buffered']
    #allocation4 [shape = 's32[1]{0}', space=sflag, size = 0x4, scoped, tag = 'scoped memory for tpu_custom_call.1']
    %10 = vsyncpa [#allocation4], 0
    // Predicated region
    $region2: #{tpu_custom_call.1} parent=1 // pred_check
      _
    $region3: #{tpu_custom_call.1} parent=1 // pred_check_branch
      %12 = sbr.rel (0) target = $region5
    $region4: #{tpu_custom_call.1} parent=1 // pred_region
      _
    $region5: #{tpu_custom_call.1} parent=1 // pred_fallthru
      _
    // Predicated region
    $region6: #{tpu_custom_call.1} parent=1 // pred_check
      _
    $region7: #{tpu_custom_call.1} parent=1 // pred_check_branch
      %14 = sbr.rel (0) target = $region9
    $region8: #{tpu_custom_call.1} parent=1 // pred_region
      _
    $region9: #{tpu_custom_call.1} parent=1 // pred_fallthru
      _
    // Predicated region
    $region10: #{tpu_custom_call.1} parent=1 // pred_check
      _
    $region11: #{tpu_custom_call.1} parent=1 // pred_check_branch
      %16 = sbr.rel (0) target = $region13
    $region12: #{tpu_custom_call.1} parent=1 // pred_region
      _
    $region13: #{tpu_custom_call.1} parent=1 // pred_fallthru
      _
    // Predicated region
    $region14: #{tpu_custom_call.1} parent=1 // pred_check
      _
    $region15: #{tpu_custom_call.1} parent=1 // pred_check_branch
      %18 = sbr.rel (0) target = $region17
    $region16: #{tpu_custom_call.1} parent=1 // pred_region
      _
    $region17: #{tpu_custom_call.1} parent=1 // pred_fallthru
      _
    // Predicated region
    $region18: #{tpu_custom_call.1} parent=1 // pred_check
      _
    $region19: #{tpu_custom_call.1} parent=1 // pred_check_branch
      %20 = sbr.rel (0) target = $region21
    $region20: #{tpu_custom_call.1} parent=1 // pred_region
      _
    $region21: #{tpu_custom_call.1} parent=1 // pred_fallthru
      _
    %p21 = scmp.eq.s32.totalorder 0, 0
    // Predicated region
    $region22: #{tpu_custom_call.1} parent=1 // pred_check
      %p22 = pneg %p21
    $region23: #{tpu_custom_call.1} parent=1 // pred_check_branch
      %24 = sbr.rel (%p22) target = $region25
    $region24: #{tpu_custom_call.1} parent=1 // pred_region
      %v25 = vld [vmem:[%s4] sm:$0x1]
      %v27 = vlaneseq
      %v28 = vshrl.u32 %v27, 7
      %v29 = vsub.s32 0, %v28
      %v30 = vrot.slane %v25, %v29
      %vm32 = vcmask 261120
      %33 = vst.msk [vmem:[#allocation2] sm:$0xff] %vm32, %v30
      %34 = vst.msk [vmem:[#allocation2 + $0x8] sm:$0xff] %vm32, %v30
    $region25: #{tpu_custom_call.1} parent=1 // pred_fallthru
      _
    %v35 = vld [vmem:[%s0] sm:$0xff]
    %v36 = vld [vmem:[%s0 + $0x8] sm:$0xff]
    %v37 = vld [vmem:[%s1] sm:$0xff]
    %v38 = vld [vmem:[%s1 + $0x8] sm:$0xff]
    %v39 = vld [vmem:[%s1 + $0x10] sm:$0xff]
    %v40 = vld [vmem:[%s1 + $0x18] sm:$0xff]
    %v41 = vld [vmem:[%s2] sm:$0x1]
    %v43 = vlaneseq
    %v44 = vshrl.u32 %v43, 7
    %v45 = vsub.s32 0, %v44
    %v46 = vrot.slane %v41, %v45
    %vm48 = vcmask 261120
    %v50 = vsel %vm48, %v35, 0
    %v53 = vsel %vm48, %v36, 0
    %55 = vmatprep.subr.mxu0 0.0
    %56 = vmatpush1.msra.mxu0 0.0
    %57 = vmatprep.subr.mxu0 0.0
    %58 = vmatpush1.msra.mxu0 0.0
    %59 = vmatprep.subr.mxu0 0.0
    %60 = vmatpush1.msra.mxu0 0.0
    %61 = vmatprep.subr.mxu0 0.0
    %62 = vmatpush1.msra.mxu0 0.0
    %63 = vmatprep.subr.mxu0 0.0
    %64 = vmatpush1.msra.mxu0 0.0
    %65 = vmatprep.subr.mxu0 0.0
    %66 = vmatpush1.msra.mxu0 0.0
    %67 = vmatprep.subr.mxu0 0.0
    %68 = vmatpush1.msra.mxu0 0.0
    %69 = vmatprep.subr.mxu0 0.0
    %70 = vmatpush1.msra.mxu0 0.0
    %71 = vmatprep.subr.mxu0 0.0
    %72 = vmatpush1.msra.mxu0 0.0
    %73 = vmatprep.subr.mxu0 0.0
    %74 = vmatpush1.msra.mxu0 0.0
    %75 = vmatprep.subr.mxu0 0.0
    %76 = vmatpush1.msra.mxu0 0.0
    %77 = vmatprep.subr.mxu0 0.0
    %78 = vmatpush1.msra.mxu0 0.0
    %79 = vmatprep.subr.mxu0 0.0
    %80 = vmatpush1.msra.mxu0 %v40
    %81 = vmatprep.subr.mxu0 0.0
    %82 = vmatpush1.msra.mxu0 %v39
    %83 = vmatprep.subr.mxu0 0.0
    %84 = vmatpush1.msra.mxu0 %v38
    %85 = vmatprep.subr.mxu0 0.0
    %86 = vmatpush1.msra.mxu0 %v37
    %87 = vmatprep.subr.mxu0 0.0
    %88 = vmatpush2.msra.mxu0 0.0
    %89 = vmatprep.subr.mxu0 0.0
    %90 = vmatpush2.msra.mxu0 0.0
    %91 = vmatprep.subr.mxu0 0.0
    %92 = vmatpush2.msra.mxu0 0.0
    %93 = vmatprep.subr.mxu0 0.0
    %94 = vmatpush2.msra.mxu0 0.0
    %95 = vmatprep.subr.mxu0 0.0
    %96 = vmatpush2.msra.mxu0 0.0
    %97 = vmatprep.subr.mxu0 0.0
    %98 = vmatpush2.msra.mxu0 0.0
    %99 = vmatprep.subr.mxu0 0.0
    %100 = vmatpush2.msra.mxu0 0.0
    %101 = vmatprep.subr.mxu0 0.0
    %102 = vmatpush2.msra.mxu0 0.0
    %103 = vmatprep.subr.mxu0 0.0
    %104 = vmatpush2.msra.mxu0 0.0
    %105 = vmatprep.subr.mxu0 0.0
    %106 = vmatpush2.msra.mxu0 0.0
    %107 = vmatprep.subr.mxu0 0.0
    %108 = vmatpush2.msra.mxu0 0.0
    %109 = vmatprep.subr.mxu0 0.0
    %110 = vmatpush2.msra.mxu0 0.0
    %111 = vmatprep.subr.mxu0 0.0
    %112 = vmatpush2.msra.mxu0 0.0
    %113 = vmatprep.subr.mxu0 0.0
    %114 = vmatpush2.msra.mxu0 0.0
    %115 = vmatprep.subr.mxu0 0.0
    %116 = vmatpush2.msra.mxu0 0.0
    %117 = vmatprep.subr.mxu0 0.0
    %118 = vmatpush2.msra.mxu0 0.0
    %119 = vmatprep.mubr.f32.mxu0 0.0
    %120 = vmatmul.mubr.f32.gmra.mxu0 %v50
    %v121 = vpop.f32.mrf.mxu0
    %v122 = vadd.f32 %v46, %v121
    %v123 = vpop.f32.mrf.mxu0
    %124 = vmatprep.mubr.f32.mxu0 0.0
    %125 = vmatmul.mubr.f32.gmra.mxu0 %v53
    %v126 = vpop.f32.mrf.mxu0
    %v127 = vadd.f32 %v46, %v126
    %v128 = vpop.f32.mrf.mxu0
    %129 = vdwg.mxu0
    %v130 = vmul.f32 %v122, 0.5
    %v131 = vmul.f32 %v127, 0.5
    %v132 = vmul.f32 %v122, 0.70710677
    %v133 = vmul.f32 %v127, 0.70710677
    %v134 = verf.f32.pop %v132
    %v135 = verf.f32.pop %v133
    %v136 = vadd.f32 %v134, 1.0
    %v137 = vadd.f32 %v135, 1.0
    %v138 = vmul.f32 %v130, %v136
    %v139 = vmul.f32 %v131, %v137
    %v140 = vld [vmem:[#allocation2] sm:$0xff]
    %v141 = vld [vmem:[#allocation2 + $0x8] sm:$0xff]
    %v142 = vld [vmem:[%s3] sm:$0xff]
    %v143 = vld [vmem:[%s3 + $0x8] sm:$0xff]
    %v144 = vld [vmem:[%s3 + $0x10] sm:$0xff]
    %v145 = vld [vmem:[%s3 + $0x18] sm:$0xff]
    %v146 = vld [vmem:[%s3 + $0x20] sm:$0xff]
    %v147 = vld [vmem:[%s3 + $0x28] sm:$0xff]
    %v148 = vld [vmem:[%s3 + $0x30] sm:$0xff]
    %v149 = vld [vmem:[%s3 + $0x38] sm:$0xff]
    %v150 = vld [vmem:[%s3 + $0x40] sm:$0xff]
    %v151 = vld [vmem:[%s3 + $0x48] sm:$0xff]
    %v152 = vld [vmem:[%s3 + $0x50] sm:$0xff]
    %v153 = vld [vmem:[%s3 + $0x58] sm:$0xff]
    %v154 = vld [vmem:[%s3 + $0x60] sm:$0xff]
    %v155 = vld [vmem:[%s3 + $0x68] sm:$0xff]
    %v156 = vld [vmem:[%s3 + $0x70] sm:$0xff]
    %v157 = vld [vmem:[%s3 + $0x78] sm:$0xff]
    %158 = vmatprep.subr.mxu0 0.0
    %159 = vmatpush1.msra.mxu0 %v157
    %160 = vmatprep.subr.mxu0 0.0
    %161 = vmatpush1.msra.mxu0 %v156
    %162 = vmatprep.subr.mxu0 0.0
    %163 = vmatpush1.msra.mxu0 %v155
    %164 = vmatprep.subr.mxu0 0.0
    %165 = vmatpush1.msra.mxu0 %v154
    %166 = vmatprep.subr.mxu0 0.0
    %167 = vmatpush1.msra.mxu0 %v153
    %168 = vmatprep.subr.mxu0 0.0
    %169 = vmatpush1.msra.mxu0 %v152
    %170 = vmatprep.subr.mxu0 0.0
    %171 = vmatpush1.msra.mxu0 %v151
    %172 = vmatprep.subr.mxu0 0.0
    %173 = vmatpush1.msra.mxu0 %v150
    %174 = vmatprep.subr.mxu0 0.0
    %175 = vmatpush1.msra.mxu0 %v149
    %176 = vmatprep.subr.mxu0 0.0
    %177 = vmatpush1.msra.mxu0 %v148
    %178 = vmatprep.subr.mxu0 0.0
    %179 = vmatpush1.msra.mxu0 %v147
    %180 = vmatprep.subr.mxu0 0.0
    %181 = vmatpush1.msra.mxu0 %v146
    %182 = vmatprep.subr.mxu0 0.0
    %183 = vmatpush1.msra.mxu0 %v145
    %184 = vmatprep.subr.mxu0 0.0
    %185 = vmatpush1.msra.mxu0 %v144
    %186 = vmatprep.subr.mxu0 0.0
    %187 = vmatpush1.msra.mxu0 %v143
    %188 = vmatprep.subr.mxu0 0.0
    %189 = vmatpush1.msra.mxu0 %v142
    %190 = vmatprep.subr.mxu0 0.0
    %191 = vmatpush2.msra.mxu0 0.0
    %192 = vmatprep.subr.mxu0 0.0
    %193 = vmatpush2.msra.mxu0 0.0
    %194 = vmatprep.subr.mxu0 0.0
    %195 = vmatpush2.msra.mxu0 0.0
    %196 = vmatprep.subr.mxu0 0.0
    %197 = vmatpush2.msra.mxu0 0.0
    %198 = vmatprep.subr.mxu0 0.0
    %199 = vmatpush2.msra.mxu0 0.0
    %200 = vmatprep.subr.mxu0 0.0
    %201 = vmatpush2.msra.mxu0 0.0
    %202 = vmatprep.subr.mxu0 0.0
    %203 = vmatpush2.msra.mxu0 0.0
    %204 = vmatprep.subr.mxu0 0.0
    %205 = vmatpush2.msra.mxu0 0.0
    %206 = vmatprep.subr.mxu0 0.0
    %207 = vmatpush2.msra.mxu0 0.0
    %208 = vmatprep.subr.mxu0 0.0
    %209 = vmatpush2.msra.mxu0 0.0
    %210 = vmatprep.subr.mxu0 0.0
    %211 = vmatpush2.msra.mxu0 0.0
    %212 = vmatprep.subr.mxu0 0.0
    %213 = vmatpush2.msra.mxu0 0.0
    %214 = vmatprep.subr.mxu0 0.0
    %215 = vmatpush2.msra.mxu0 0.0
    %216 = vmatprep.subr.mxu0 0.0
    %217 = vmatpush2.msra.mxu0 0.0
    %218 = vmatprep.subr.mxu0 0.0
    %219 = vmatpush2.msra.mxu0 0.0
    %220 = vmatprep.subr.mxu0 0.0
    %221 = vmatpush2.msra.mxu0 0.0
    %222 = vmatprep.mubr.f32.mxu0 0.0
    %223 = vmatmul.mubr.f32.gmra.mxu0 %v138
    %v224 = vpop.f32.mrf.mxu0
    %v225 = vadd.f32 0.0, %v224
    %v226 = vpop.f32.mrf.mxu0
    %227 = vmatprep.mubr.f32.mxu0 0.0
    %228 = vmatmul.mubr.f32.gmra.mxu0 %v139
    %v229 = vpop.f32.mrf.mxu0
    %v230 = vadd.f32 0.0, %v229
    %v231 = vpop.f32.mrf.mxu0
    %232 = vdwg.mxu0
    %v233 = vadd.f32 %v140, %v225
    %v234 = vadd.f32 %v141, %v230
    %235 = vst.msk [vmem:[#allocation2] sm:$0xff] %vm48, %v233
    %236 = vst.msk [vmem:[#allocation2 + $0x8] sm:$0xff] %vm48, %v234
    // Predicated region
    $region26: #{tpu_custom_call.1} parent=1 // pred_check
      %p237 = pneg %p21
    $region27: #{tpu_custom_call.1} parent=1 // pred_check_branch
      %239 = sbr.rel (%p237) target = $region29
    $region28: #{tpu_custom_call.1} parent=1 // pred_region
      %v240 = vld [vmem:[#allocation2] sm:$0xff]
      %v241 = vld [vmem:[#allocation2 + $0x8] sm:$0xff]
      %242 = vst.msk [vmem:[#allocation3] sm:$0xff] %vm48, %v240
      %243 = vst.msk [vmem:[#allocation3 + $0x8] sm:$0xff] %vm48, %v241
    $region29: #{tpu_custom_call.1} parent=1 // pred_fallthru
      _
    // Predicated region
    $region30: #{tpu_custom_call.1} parent=1 // pred_check
      _
    $region31: #{tpu_custom_call.1} parent=1 // pred_check_branch
      %245 = sbr.rel (0) target = $region33
    $region32: #{tpu_custom_call.1} parent=1 // pred_region
      %s247 = ssub.s32 256, 256
      %248 = vsyncadd [#allocation4], %s247
      %s249 = sshll.u32 [#allocation3], 4
      %s250 = int_to_ptr.vmem [resolvable:$true] %s249
      %255 = dma.vmem_to_hbm [thread:$0]  %s250, 256, %s5, [#allocation4], 128, 128, 8
    $region33: #{tpu_custom_call.1} parent=1 // pred_fallthru
      _
    // Predicated region
    $region34: #{tpu_custom_call.1} parent=1 // pred_check
      _
    $region35: #{tpu_custom_call.1} parent=1 // pred_check_branch
      %257 = sbr.rel (0) target = $region37
    $region36: #{tpu_custom_call.1} parent=1 // pred_region
      %258 = dma.done [#allocation4], 256
    $region37: #{tpu_custom_call.1} parent=1 // pred_fallthru
      _
    %259 = vsyncpa [#allocation4], 1

</llo_original>
